<compile_context>
chip_gen: v7x
topology: tpu7x:2x2x1
jax: 0.10.0
libtpu: 0.0.40
codegen_flags: <defaults>
</compile_context>

<pallas_src>
import jax
import jax.numpy as jnp
from jax import lax
from jax.experimental import pallas as pl
from jax.experimental.pallas import tpu as pltpu

FAST_SIZE = 32
SLOW_SIZE = 16
HIDDEN = 32
HIDDEN2 = HIDDEN // 2             # 16
LANE = 128
MAX_TILE = 16384                  # batch rows per grid step (multi-MiB blocks)
SPLIT_THRESHOLD = 1024            # above this, force >= 2 grid steps (megacore)


def _cdiv(a, b):
    return -(-a // b)


def _round_up(n, m):
    return _cdiv(n, m) * m


def _choose_tile(B):
    """Pick the batch-tile (rows per grid step).

    * B <= SPLIT_THRESHOLD: one exact block (block dims == array dims, so no
      (8,128) divisibility requirement, no padding, no ragged handling).
    * Larger B: multi-MiB tiles to amortize per-grid-step overhead, rounded to
      a lane multiple, capped at MAX_TILE, and sized so the grid has >= 2
      steps -> "parallel" semantics can shard tiles across both v7x cores.
      VMEM/step at MAX_TILE=16384 (f32): 2 x (2 MiB fast + 1 MiB slow) input
      double-buffers + ~3 MiB f32 intermediates ~= 10 MiB, comfortably inside
      the 32 MiB scoped-VMEM limit requested below on every generation.
    """
    if B <= SPLIT_THRESHOLD:
        return B
    return min(MAX_TILE, _round_up(_cdiv(B, 2), LANE))


def integration_kernel(fast_ref, slow_ref, w1f_ref, w1s_ref, b1_ref,
                       w2_ref, b2_ref, w3_ref, b3_ref, out_ref):
    """One batch tile of IntegrationNet (eval mode: dropout == identity).

    fast_ref: [TB, 32] f32, slow_ref: [TB, 16] f32 (native batch-major layout).
    All intermediates are feature-major / lane-dense; output is an unmasked
    lane-dense [1, TB] store.

    Ragged last tile note: out-of-range batch rows contain garbage, but every
    contraction here only mixes the (fully valid) feature axis, so garbage
    stays in its own batch lane and is dropped by the partial output
    writeback.  Do NOT add any cross-batch (cross-lane) reduction here.
    """
    dn = (((1,), (1,)), ((), ()))   # contract last axis of each operand

    # fc1 + ReLU: W1f[H,32] . fast^T  +  W1s[H,16] . slow^T  -> [HIDDEN, TB]
    h1 = (lax.dot_general(w1f_ref[...], fast_ref[...], dn,
                          preferred_element_type=jnp.float32)
          + lax.dot_general(w1s_ref[...], slow_ref[...], dn,
                            preferred_element_type=jnp.float32)
          + b1_ref[...])
    h1 = jnp.maximum(h1, 0.0)
    # dropout: identity in eval mode

    # fc2 + ReLU: [HIDDEN2, HIDDEN] @ [HIDDEN, TB] -> [HIDDEN2, TB]
    h2 = jnp.dot(w2_ref[...], h1, preferred_element_type=jnp.float32) + b2_ref[...]
    h2 = jnp.maximum(h2, 0.0)
    # dropout: identity in eval mode

    # fc3: single output row -> VPU multiply + sublane reduce (MXU not needed)
    logits = jnp.sum(h2 * w3_ref[...], axis=0, keepdims=True) + b3_ref[...]  # [1, TB]

    # Exact sigmoid (exp hits the EUP; the divide is free at this roofline).
    out_ref[...] = (1.0 / (1.0 + jnp.exp(-logits))).astype(out_ref.dtype)


def integration_net(fast, slow, params):
    """fast: [B, 32] f32, slow: [B, 16] f32 -> [B, 1] f32 sigmoid output."""
    w1f, w1s, b1, w2, b2, w3c, b3 = params
    B = fast.shape[0]
    tb = _choose_tile(B)
    grid = (_cdiv(B, tb),)          # ragged last block handled by Pallas

    resident = lambda shape: pl.BlockSpec(shape, lambda i: (0, 0))

    out_t = pl.pallas_call(
        integration_kernel,
        out_shape=jax.ShapeDtypeStruct((1, B), jnp.float32),
        grid_spec=pltpu.PrefetchScalarGridSpec(
            num_scalar_prefetch=0,
            grid=grid,
            in_specs=[
                # activation streams in native [B, F] layout, batch-tiled and
                # auto double-buffered
                pl.BlockSpec((tb, FAST_SIZE), lambda i: (i, 0)),
                pl.BlockSpec((tb, SLOW_SIZE), lambda i: (i, 0)),
                # weights / biases: constant index_map -> VMEM-resident
                resident(w1f.shape), resident(w1s.shape), resident(b1.shape),
                resident(w2.shape), resident(b2.shape),
                resident(w3c.shape), resident(b3.shape),
            ],
            out_specs=pl.BlockSpec((1, tb), lambda i: (0, i)),
        ),
        compiler_params=pltpu.CompilerParams(
            dimension_semantics=("parallel",),    # megacore sharding on v7x
            vmem_limit_bytes=32 * 1024 * 1024,    # headroom for multi-MiB tiles
        ),
    )(fast, slow, w1f, w1s, b1, w2, b2, w3c, b3)

    # [1, B] feature-major (lane-dense in-kernel store) -> [B, 1] like PyTorch.
    return out_t.T


def init_params(key):
    """Deterministic init mimicking nn.Linear (uniform +/- 1/sqrt(fan_in))."""
    ks = jax.random.split(key, 6)

    def lin(kw, kb, fan_in, fan_out):
        bound = 1.0 / jnp.sqrt(fan_in)
        w = jax.random.uniform(kw, (fan_out, fan_in), jnp.float32, -bound, bound)
        b = jax.random.uniform(kb, (fan_out,), jnp.float32, -bound, bound)
        return w, b

    w1, b1 = lin(ks[0], ks[1], FAST_SIZE + SLOW_SIZE, HIDDEN)
    w2, b2 = lin(ks[2], ks[3], HIDDEN, HIDDEN2)
    w3, b3 = lin(ks[4], ks[5], HIDDEN2, 1)
    raw = (w1, b1, w2, b2, w3, b3)

    # Kernel layout: W1 split along its input axis (fast | slow) so the two
    # activation streams are consumed without a concat pass; biases become
    # column vectors (broadcast against feature-major [F, TB] tiles); W3 is a
    # [HIDDEN2, 1] column for the multiply-reduce fc3.
    kernel_params = (w1[:, :FAST_SIZE], w1[:, FAST_SIZE:], b1[:, None],
                     w2, b2[:, None], w3.T, b3[:, None])
    return kernel_params, raw


def reference_forward(fast, slow, raw_params):
    """Plain-JAX reference matching the PyTorch forward (eval mode)."""
    w1, b1, w2, b2, w3, b3 = raw_params
    x = jnp.concatenate([fast, slow], axis=1)
    x = jnp.maximum(x @ w1.T + b1, 0.0)
    x = jnp.maximum(x @ w2.T + b2, 0.0)
    return jax.nn.sigmoid(x @ w3.T + b3)


if __name__ == "__main__":
    key = jax.random.PRNGKey(0)
    k_fast, k_slow, k_params, k_fast2, k_slow2 = jax.random.split(key, 5)

    params, raw_params = init_params(k_params)

    # Small demo batch: single exact block (block dims == array dims).
    B = 8
    fast = jax.random.normal(k_fast, (B, FAST_SIZE), jnp.float32)
    slow = jax.random.normal(k_slow, (B, SLOW_SIZE), jnp.float32)
    out = jax.block_until_ready(integration_net(fast, slow, params))
    ref = reference_forward(fast, slow, raw_params)
    assert out.shape == (B, 1)
    assert jnp.allclose(out, ref, atol=1e-3, rtol=0.0), "small-batch mismatch"

    # Larger batch exercising the tiled path (grid >= 2, ragged last tile).
    B2 = 2600
    fast2 = jax.random.normal(k_fast2, (B2, FAST_SIZE), jnp.float32)
    slow2 = jax.random.normal(k_slow2, (B2, SLOW_SIZE), jnp.float32)
    out2 = jax.block_until_ready(integration_net(fast2, slow2, params))
    ref2 = reference_forward(fast2, slow2, raw_params)
    assert out2.shape == (B2, 1)
    assert jnp.allclose(out2, ref2, atol=1e-3, rtol=0.0), "tiled-batch mismatch"

    print("KERNEL_OK")
</pallas_src>

<mosaic_0001>
module attributes {stable_mosaic.version = 11 : i64} {
  func.func @integration_kernel(%arg0: i32, %arg1: memref<8x32xf32, #tpu.memory_space<vmem>>, %arg2: memref<8x16xf32, #tpu.memory_space<vmem>>, %arg3: memref<32x32xf32, #tpu.memory_space<vmem>>, %arg4: memref<32x16xf32, #tpu.memory_space<vmem>>, %arg5: memref<32x1xf32, #tpu.memory_space<vmem>>, %arg6: memref<16x32xf32, #tpu.memory_space<vmem>>, %arg7: memref<16x1xf32, #tpu.memory_space<vmem>>, %arg8: memref<16x1xf32, #tpu.memory_space<vmem>>, %arg9: memref<1x1xf32, #tpu.memory_space<vmem>>, %arg10: memref<1x8xf32, #tpu.memory_space<vmem>>) attributes {dimension_semantics = [#tpu.dimension_semantics<parallel>], iteration_bounds = array<i64: 1>, scalar_prefetch = 0 : i64, scratch_operands = 0 : i64, tpu.core_type = #tpu.core_type<tc>, window_params = [{transform_indices = @transform_0, window_bounds = array<i64: 8, 32>}, {transform_indices = @transform_1, window_bounds = array<i64: 8, 16>}, {pipeline_mode = #tpu.pipeline_mode<synchronous>, transform_indices = @transform_2, window_bounds = array<i64: 32, 32>}, {pipeline_mode = #tpu.pipeline_mode<synchronous>, transform_indices = @transform_3, window_bounds = array<i64: 32, 16>}, {pipeline_mode = #tpu.pipeline_mode<synchronous>, transform_indices = @transform_4, window_bounds = array<i64: 32, 1>}, {pipeline_mode = #tpu.pipeline_mode<synchronous>, transform_indices = @transform_5, window_bounds = array<i64: 16, 32>}, {pipeline_mode = #tpu.pipeline_mode<synchronous>, transform_indices = @transform_6, window_bounds = array<i64: 16, 1>}, {pipeline_mode = #tpu.pipeline_mode<synchronous>, transform_indices = @transform_7, window_bounds = array<i64: 16, 1>}, {pipeline_mode = #tpu.pipeline_mode<synchronous>, transform_indices = @transform_8, window_bounds = array<i64: 1, 1>}, {transform_indices = @transform_9, window_bounds = array<i64: 1, 8>}]} {
    %c0 = arith.constant 0 : index
    %c0_0 = arith.constant 0 : index
    %0 = vector.load %arg3[%c0, %c0_0] : memref<32x32xf32, #tpu.memory_space<vmem>>, vector<32x32xf32>
    %c0_1 = arith.constant 0 : index
    %c0_2 = arith.constant 0 : index
    %1 = vector.load %arg1[%c0_1, %c0_2] : memref<8x32xf32, #tpu.memory_space<vmem>>, vector<8x32xf32>
    %cst = arith.constant dense<0.000000e+00> : vector<32x8xf32>
    %2 = tpu.matmul %0, %1, %cst {dimension_numbers = #tpu.dot_dimension_numbers<[1], [1], [0], [0], [0, 0, 1, 0], [], []>} : vector<32x32xf32>, vector<8x32xf32>, vector<32x8xf32> -> vector<32x8xf32>
    %c0_3 = arith.constant 0 : index
    %c0_4 = arith.constant 0 : index
    %3 = vector.load %arg4[%c0_3, %c0_4] : memref<32x16xf32, #tpu.memory_space<vmem>>, vector<32x16xf32>
    %c0_5 = arith.constant 0 : index
    %c0_6 = arith.constant 0 : index
    %4 = vector.load %arg2[%c0_5, %c0_6] : memref<8x16xf32, #tpu.memory_space<vmem>>, vector<8x16xf32>
    %cst_7 = arith.constant dense<0.000000e+00> : vector<32x8xf32>
    %5 = tpu.matmul %3, %4, %cst_7 {dimension_numbers = #tpu.dot_dimension_numbers<[1], [1], [0], [0], [0, 0, 1, 0], [], []>} : vector<32x16xf32>, vector<8x16xf32>, vector<32x8xf32> -> vector<32x8xf32>
    %6 = arith.addf %2, %5 : vector<32x8xf32>
    %c0_8 = arith.constant 0 : index
    %c0_9 = arith.constant 0 : index
    %7 = vector.load %arg5[%c0_8, %c0_9] : memref<32x1xf32, #tpu.memory_space<vmem>>, vector<32x1xf32>
    %8 = vector.broadcast %7 : vector<32x1xf32> to vector<32x8xf32>
    %9 = arith.addf %6, %8 : vector<32x8xf32>
    %cst_10 = arith.constant 0.000000e+00 : f32
    %10 = vector.broadcast %cst_10 : f32 to vector<32x8xf32>
    %11 = arith.maximumf %9, %10 : vector<32x8xf32>
    %c0_11 = arith.constant 0 : index
    %c0_12 = arith.constant 0 : index
    %12 = vector.load %arg6[%c0_11, %c0_12] : memref<16x32xf32, #tpu.memory_space<vmem>>, vector<16x32xf32>
    %cst_13 = arith.constant dense<0.000000e+00> : vector<16x8xf32>
    %13 = tpu.matmul %12, %11, %cst_13 {dimension_numbers = #tpu.dot_dimension_numbers<[1], [0], [0], [1], [0, 0, 1, 1], [], []>} : vector<16x32xf32>, vector<32x8xf32>, vector<16x8xf32> -> vector<16x8xf32>
    %c0_14 = arith.constant 0 : index
    %c0_15 = arith.constant 0 : index
    %14 = vector.load %arg7[%c0_14, %c0_15] : memref<16x1xf32, #tpu.memory_space<vmem>>, vector<16x1xf32>
    %15 = vector.broadcast %14 : vector<16x1xf32> to vector<16x8xf32>
    %16 = arith.addf %13, %15 : vector<16x8xf32>
    %cst_16 = arith.constant 0.000000e+00 : f32
    %17 = vector.broadcast %cst_16 : f32 to vector<16x8xf32>
    %18 = arith.maximumf %16, %17 : vector<16x8xf32>
    %c0_17 = arith.constant 0 : index
    %c0_18 = arith.constant 0 : index
    %19 = vector.load %arg8[%c0_17, %c0_18] : memref<16x1xf32, #tpu.memory_space<vmem>>, vector<16x1xf32>
    %20 = vector.broadcast %19 : vector<16x1xf32> to vector<16x8xf32>
    %21 = arith.mulf %18, %20 : vector<16x8xf32>
    %cst_19 = arith.constant dense<0.000000e+00> : vector<8xf32>
    %22 = vector.multi_reduction <add>, %21, %cst_19 [0] : vector<16x8xf32> to vector<8xf32>
    %23 = vector.shape_cast %22 : vector<8xf32> to vector<1x8xf32>
    %c0_20 = arith.constant 0 : index
    %c0_21 = arith.constant 0 : index
    %24 = vector.load %arg9[%c0_20, %c0_21] : memref<1x1xf32, #tpu.memory_space<vmem>>, vector<1x1xf32>
    %25 = vector.broadcast %24 : vector<1x1xf32> to vector<1x8xf32>
    %26 = arith.addf %23, %25 : vector<1x8xf32>
    %cst_22 = arith.constant 0.000000e+00 : f32
    %27 = vector.broadcast %cst_22 : f32 to vector<1x8xf32>
    %28 = arith.subf %27, %26 : vector<1x8xf32>
    %29 = math.exp %28 : vector<1x8xf32>
    %cst_23 = arith.constant 1.000000e+00 : f32
    %30 = vector.broadcast %cst_23 : f32 to vector<1x8xf32>
    %31 = arith.addf %30, %29 : vector<1x8xf32>
    %cst_24 = arith.constant 1.000000e+00 : f32
    %32 = vector.broadcast %cst_24 : f32 to vector<1x8xf32>
    %33 = arith.divf %32, %31 : vector<1x8xf32>
    %c0_25 = arith.constant 0 : index
    %c0_26 = arith.constant 0 : index
    %34 = vector.load %arg10[%c0_25, %c0_26] : memref<1x8xf32, #tpu.memory_space<vmem>>, vector<1x8xf32>
    tpu.vector_store %arg10[%c0_25, %c0_26], %33 {strides = array<i32>} : memref<1x8xf32, #tpu.memory_space<vmem>>, vector<1x8xf32>,
    return
  }
  func.func @transform_0(%arg0: i32) -> (i32, i32) {
    %c0_i32 = arith.constant 0 : i32
    %c0_i32_0 = arith.constant 0 : i32
    return %arg0, %c0_i32 : i32, i32
  }
  func.func @transform_1(%arg0: i32) -> (i32, i32) {
    %c0_i32 = arith.constant 0 : i32
    %c0_i32_0 = arith.constant 0 : i32
    return %arg0, %c0_i32 : i32, i32
  }
  func.func @transform_2(%arg0: i32) -> (i32, i32) {
    %c0_i32 = arith.constant 0 : i32
    %c0_i32_0 = arith.constant 0 : i32
    %c0_i32_1 = arith.constant 0 : i32
    return %c0_i32, %c0_i32_0 : i32, i32
  }
  func.func @transform_3(%arg0: i32) -> (i32, i32) {
    %c0_i32 = arith.constant 0 : i32
    %c0_i32_0 = arith.constant 0 : i32
    %c0_i32_1 = arith.constant 0 : i32
    return %c0_i32, %c0_i32_0 : i32, i32
  }
  func.func @transform_4(%arg0: i32) -> (i32, i32) {
    %c0_i32 = arith.constant 0 : i32
    %c0_i32_0 = arith.constant 0 : i32
    %c0_i32_1 = arith.constant 0 : i32
    return %c0_i32, %c0_i32_0 : i32, i32
  }
  func.func @transform_5(%arg0: i32) -> (i32, i32) {
    %c0_i32 = arith.constant 0 : i32
    %c0_i32_0 = arith.constant 0 : i32
    %c0_i32_1 = arith.constant 0 : i32
    return %c0_i32, %c0_i32_0 : i32, i32
  }
  func.func @transform_6(%arg0: i32) -> (i32, i32) {
    %c0_i32 = arith.constant 0 : i32
    %c0_i32_0 = arith.constant 0 : i32
    %c0_i32_1 = arith.constant 0 : i32
    return %c0_i32, %c0_i32_0 : i32, i32
  }
  func.func @transform_7(%arg0: i32) -> (i32, i32) {
    %c0_i32 = arith.constant 0 : i32
    %c0_i32_0 = arith.constant 0 : i32
    %c0_i32_1 = arith.constant 0 : i32
    return %c0_i32, %c0_i32_0 : i32, i32
  }
  func.func @transform_8(%arg0: i32) -> (i32, i32) {
    %c0_i32 = arith.constant 0 : i32
    %c0_i32_0 = arith.constant 0 : i32
    %c0_i32_1 = arith.constant 0 : i32
    return %c0_i32, %c0_i32_0 : i32, i32
  }
  func.func @transform_9(%arg0: i32) -> (i32, i32) {
    %c0_i32 = arith.constant 0 : i32
    %c0_i32_0 = arith.constant 0 : i32
    return %c0_i32, %arg0 : i32, i32
  }
}

</mosaic_0001>

<llo_original>
// kernel: tpu_custom_call.1
$region0: #{tpu_custom_call.1}
  #allocation0 [shape = 'u32[]', space=smem, size = 0x4, offset = 0x4, fixed_abs, tag = 'smem constant byte address 0x4 - core index']
  #allocation1 [shape = 'u32[144,128]{1,0:T(1,128)}', space=vmem, size = 0x12000, scoped, tag = 'internal scratch']
  #allocation2 [shape = 'f32[1,1]{1,0:T(1,128)S(1)}', space=vmem, size = 0x200, scoped, tag = 'scoped memory for tpu_custom_call.1']
  %s0 = inlined_call_operand.vmem [shape: f32[8,32], index: 0, kind: input, shape index: {}]
  %s1 = inlined_call_operand.vmem [shape: f32[8,16], index: 1, kind: input, shape index: {}]
  %s2 = inlined_call_operand.vmem [shape: f32[32,32], index: 2, kind: input, shape index: {}]
  %s3 = inlined_call_operand.vmem [shape: f32[32,16], index: 3, kind: input, shape index: {}]
  %s4 = inlined_call_operand.vmem [shape: f32[32,1], index: 4, kind: input, shape index: {}]
  %s5 = inlined_call_operand.vmem [shape: f32[16,32], index: 5, kind: input, shape index: {}]
  %s6 = inlined_call_operand.vmem [shape: f32[16,1], index: 6, kind: input, shape index: {}]
  %s7 = inlined_call_operand.vmem [shape: f32[16,1], index: 7, kind: input, shape index: {}]
  %s8 = inlined_call_operand.<no memory space> [shape: f32[1,1], index: 8, kind: input, shape index: {}]
  %s9 = inlined_call_operand.hbm [shape: f32[1,8], index: 9, kind: output, shape index: {}]
  %s10 = sld [smem:[#allocation0]]
  $region46: #{tpu_custom_call.1} parent=0
    _
  %s12 = ssub.s32 1, %s10
  %s13 = scalar_select 0, %s12, %s10
  %v14 = vstv %s8
  %15 = vst [vmem:[#allocation2] sm:$0x1] %v14
  $region1: #{tpu_custom_call.1} parent=0
    #allocation3 [shape = 'u8[512]{0}', space=vmem, size = 0x400, scoped, tag = 'output window, operand 0, single buffered']
    #allocation4 [shape = 's32[1]{0}', space=sflag, size = 0x4, scoped, tag = 'scoped memory for tpu_custom_call.1']
    %16 = vsyncpa [#allocation4], 0
    // Predicated region
    $region2: #{tpu_custom_call.1} parent=1 // pred_check
      _
    $region3: #{tpu_custom_call.1} parent=1 // pred_check_branch
      %18 = sbr.rel (0) target = $region5
    $region4: #{tpu_custom_call.1} parent=1 // pred_region
      _
    $region5: #{tpu_custom_call.1} parent=1 // pred_fallthru
      _
    // Predicated region
    $region6: #{tpu_custom_call.1} parent=1 // pred_check
      _
    $region7: #{tpu_custom_call.1} parent=1 // pred_check_branch
      %20 = sbr.rel (0) target = $region9
    $region8: #{tpu_custom_call.1} parent=1 // pred_region
      _
    $region9: #{tpu_custom_call.1} parent=1 // pred_fallthru
      _
    // Predicated region
    $region10: #{tpu_custom_call.1} parent=1 // pred_check
      _
    $region11: #{tpu_custom_call.1} parent=1 // pred_check_branch
      %22 = sbr.rel (0) target = $region13
    $region12: #{tpu_custom_call.1} parent=1 // pred_region
      _
    $region13: #{tpu_custom_call.1} parent=1 // pred_fallthru
      _
    // Predicated region
    $region14: #{tpu_custom_call.1} parent=1 // pred_check
      _
    $region15: #{tpu_custom_call.1} parent=1 // pred_check_branch
      %24 = sbr.rel (0) target = $region17
    $region16: #{tpu_custom_call.1} parent=1 // pred_region
      _
    $region17: #{tpu_custom_call.1} parent=1 // pred_fallthru
      _
    // Predicated region
    $region18: #{tpu_custom_call.1} parent=1 // pred_check
      _
    $region19: #{tpu_custom_call.1} parent=1 // pred_check_branch
      %26 = sbr.rel (0) target = $region21
    $region20: #{tpu_custom_call.1} parent=1 // pred_region
      _
    $region21: #{tpu_custom_call.1} parent=1 // pred_fallthru
      _
    // Predicated region
    $region22: #{tpu_custom_call.1} parent=1 // pred_check
      _
    $region23: #{tpu_custom_call.1} parent=1 // pred_check_branch
      %28 = sbr.rel (0) target = $region25
    $region24: #{tpu_custom_call.1} parent=1 // pred_region
      _
    $region25: #{tpu_custom_call.1} parent=1 // pred_fallthru
      _
    // Predicated region
    $region26: #{tpu_custom_call.1} parent=1 // pred_check
      _
    $region27: #{tpu_custom_call.1} parent=1 // pred_check_branch
      %30 = sbr.rel (0) target = $region29
    $region28: #{tpu_custom_call.1} parent=1 // pred_region
      _
    $region29: #{tpu_custom_call.1} parent=1 // pred_fallthru
      _
    // Predicated region
    $region30: #{tpu_custom_call.1} parent=1 // pred_check
      _
    $region31: #{tpu_custom_call.1} parent=1 // pred_check_branch
      %32 = sbr.rel (0) target = $region33
    $region32: #{tpu_custom_call.1} parent=1 // pred_region
      _
    $region33: #{tpu_custom_call.1} parent=1 // pred_fallthru
      _
    // Predicated region
    $region34: #{tpu_custom_call.1} parent=1 // pred_check
      _
    $region35: #{tpu_custom_call.1} parent=1 // pred_check_branch
      %34 = sbr.rel (0) target = $region37
    $region36: #{tpu_custom_call.1} parent=1 // pred_region
      _
    $region37: #{tpu_custom_call.1} parent=1 // pred_fallthru
      _
    %v35 = vld [vmem:[%s2] sm:$0xff]
    %v36 = vld [vmem:[%s2 + $0x8] sm:$0xff]
    %v37 = vld [vmem:[%s2 + $0x10] sm:$0xff]
    %v38 = vld [vmem:[%s2 + $0x18] sm:$0xff]
    %v39 = vld [vmem:[%s0] sm:$0xff]
    %v40 = vld [vmem:[%s3] sm:$0xff]
    %v41 = vld [vmem:[%s3 + $0x8] sm:$0xff]
    %v42 = vld [vmem:[%s3 + $0x10] sm:$0xff]
    %v43 = vld [vmem:[%s3 + $0x18] sm:$0xff]
    %v44 = vld [vmem:[%s1] sm:$0xff]
    %vm45 = vcmask 130048
    %v47 = vsel %vm45, %v40, 0
    %v50 = vsel %vm45, %v41, 0
    %v53 = vsel %vm45, %v42, 0
    %v56 = vsel %vm45, %v43, 0
    %v59 = vsel %vm45, %v44, 0
    %61 = vmatprep.subr.mxu0 0.0
    %62 = vmatpush1.xpose.msra.mxu0 %v59
    %63 = vmatprep.subr.mxu0 0.0
    %64 = vmatpush1.xpose.msra.mxu0 0.0
    %65 = vmatprep.subr.mxu0 0.0
    %66 = vmatpush1.xpose.msra.mxu0 0.0
    %67 = vmatprep.subr.mxu0 0.0
    %68 = vmatpush1.xpose.msra.mxu0 0.0
    %69 = vmatprep.subr.mxu0 0.0
    %70 = vmatpush1.xpose.msra.mxu0 0.0
    %71 = vmatprep.subr.mxu0 0.0
    %72 = vmatpush1.xpose.msra.mxu0 0.0
    %73 = vmatprep.subr.mxu0 0.0
    %74 = vmatpush1.xpose.msra.mxu0 0.0
    %75 = vmatprep.subr.mxu0 0.0
    %76 = vmatpush1.xpose.msra.mxu0 0.0
    %77 = vmatprep.subr.mxu0 0.0
    %78 = vmatpush1.xpose.msra.mxu0 0.0
    %79 = vmatprep.subr.mxu0 0.0
    %80 = vmatpush1.xpose.msra.mxu0 0.0
    %81 = vmatprep.subr.mxu0 0.0
    %82 = vmatpush1.xpose.msra.mxu0 0.0
    %83 = vmatprep.subr.mxu0 0.0
    %84 = vmatpush1.xpose.msra.mxu0 0.0
    %85 = vmatprep.subr.mxu0 0.0
    %86 = vmatpush1.xpose.msra.mxu0 0.0
    %87 = vmatprep.subr.mxu0 0.0
    %88 = vmatpush1.xpose.msra.mxu0 0.0
    %89 = vmatprep.subr.mxu0 0.0
    %90 = vmatpush1.xpose.msra.mxu0 0.0
    %91 = vmatprep.subr.mxu0 0.0
    %92 = vmatpush1.xpose.msra.mxu0 0.0
    %93 = vmatprep.subr.mxu0 0.0
    %94 = vmatpush1.xpose.msra.mxu0 0.0
    %95 = vmatprep.subr.mxu0 0.0
    %96 = vmatpush1.xpose.msra.mxu0 0.0
    %97 = vmatprep.subr.mxu0 0.0
    %98 = vmatpush1.xpose.msra.mxu0 0.0
    %99 = vmatprep.subr.mxu0 0.0
    %100 = vmatpush1.xpose.msra.mxu0 0.0
    %101 = vmatprep.subr.mxu0 0.0
    %102 = vmatpush1.xpose.msra.mxu0 0.0
    %103 = vmatprep.subr.mxu0 0.0
    %104 = vmatpush1.xpose.msra.mxu0 0.0
    %105 = vmatprep.subr.mxu0 0.0
    %106 = vmatpush1.xpose.msra.mxu0 0.0
    %107 = vmatprep.subr.mxu0 0.0
    %108 = vmatpush1.xpose.msra.mxu0 0.0
    %109 = vmatprep.subr.mxu0 0.0
    %110 = vmatpush1.xpose.msra.mxu0 0.0
    %111 = vmatprep.subr.mxu0 0.0
    %112 = vmatpush1.xpose.msra.mxu0 0.0
    %113 = vmatprep.subr.mxu0 0.0
    %114 = vmatpush1.xpose.msra.mxu0 0.0
    %115 = vmatprep.subr.mxu0 0.0
    %116 = vmatpush1.xpose.msra.mxu0 0.0
    %117 = vmatprep.subr.mxu0 0.0
    %118 = vmatpush1.xpose.msra.mxu0 0.0
    %119 = vmatprep.subr.mxu0 0.0
    %120 = vmatpush1.xpose.msra.mxu0 0.0
    %121 = vmatprep.subr.mxu0 0.0
    %122 = vmatpush1.xpose.msra.mxu0 0.0
    %123 = vmatprep.subr.mxu0 0.0
    %124 = vmatpush1.xpose.msra.mxu0 0.0
    %125 = vmatprep.mubr.f32.mxu0 0.0
    %126 = vmatmul.mubr.f32.gmra.mrb[0].mxu0 %v47
    %v127 = vpop.f32.mrb[0].mxu0
    %v128 = vadd.f32 0.0, %v127
    %v129 = vpop.f32.mrb[0].mxu0
    %130 = vmatprep.mubr.f32.mxu0 0.0
    %131 = vmatmul.mubr.f32.gmra.mrb[0].mxu0 %v50
    %v132 = vpop.f32.mrb[0].mxu0
    %v133 = vadd.f32 0.0, %v132
    %v134 = vpop.f32.mrb[0].mxu0
    %135 = vmatprep.mubr.f32.mxu0 0.0
    %136 = vmatmul.mubr.f32.gmra.mrb[0].mxu0 %v53
    %v137 = vpop.f32.mrb[0].mxu0
    %v138 = vadd.f32 0.0, %v137
    %v139 = vpop.f32.mrb[0].mxu0
    %140 = vmatprep.mubr.f32.mxu0 0.0
    %141 = vmatmul.mubr.f32.gmra.mrb[0].mxu0 %v56
    %v142 = vpop.f32.mrb[0].mxu0
    %v143 = vadd.f32 0.0, %v142
    %v144 = vpop.f32.mrb[0].mxu0
    %145 = vdwg.mxu0
    %vm146 = vcmask 261120
    %v148 = vsel %vm146, %v35, 0
    %v151 = vsel %vm146, %v36, 0
    %v154 = vsel %vm146, %v37, 0
    %v157 = vsel %vm146, %v38, 0
    %v160 = vsel %vm146, %v39, 0
    %162 = vmatprep.subr.mxu0 0.0
    %163 = vmatpush1.xpose.msra.mxu0 %v160
    %164 = vmatprep.subr.mxu0 0.0
    %165 = vmatpush1.xpose.msra.mxu0 0.0
    %166 = vmatprep.subr.mxu0 0.0
    %167 = vmatpush1.xpose.msra.mxu0 0.0
    %168 = vmatprep.subr.mxu0 0.0
    %169 = vmatpush1.xpose.msra.mxu0 0.0
    %170 = vmatprep.subr.mxu0 0.0
    %171 = vmatpush1.xpose.msra.mxu0 0.0
    %172 = vmatprep.subr.mxu0 0.0
    %173 = vmatpush1.xpose.msra.mxu0 0.0
    %174 = vmatprep.subr.mxu0 0.0
    %175 = vmatpush1.xpose.msra.mxu0 0.0
    %176 = vmatprep.subr.mxu0 0.0
    %177 = vmatpush1.xpose.msra.mxu0 0.0
    %178 = vmatprep.subr.mxu0 0.0
    %179 = vmatpush1.xpose.msra.mxu0 0.0
    %180 = vmatprep.subr.mxu0 0.0
    %181 = vmatpush1.xpose.msra.mxu0 0.0
    %182 = vmatprep.subr.mxu0 0.0
    %183 = vmatpush1.xpose.msra.mxu0 0.0
    %184 = vmatprep.subr.mxu0 0.0
    %185 = vmatpush1.xpose.msra.mxu0 0.0
    %186 = vmatprep.subr.mxu0 0.0
    %187 = vmatpush1.xpose.msra.mxu0 0.0
    %188 = vmatprep.subr.mxu0 0.0
    %189 = vmatpush1.xpose.msra.mxu0 0.0
    %190 = vmatprep.subr.mxu0 0.0
    %191 = vmatpush1.xpose.msra.mxu0 0.0
    %192 = vmatprep.subr.mxu0 0.0
    %193 = vmatpush1.xpose.msra.mxu0 0.0
    %194 = vmatprep.subr.mxu0 0.0
    %195 = vmatpush1.xpose.msra.mxu0 0.0
    %196 = vmatprep.subr.mxu0 0.0
    %197 = vmatpush1.xpose.msra.mxu0 0.0
    %198 = vmatprep.subr.mxu0 0.0
    %199 = vmatpush1.xpose.msra.mxu0 0.0
    %200 = vmatprep.subr.mxu0 0.0
    %201 = vmatpush1.xpose.msra.mxu0 0.0
    %202 = vmatprep.subr.mxu0 0.0
    %203 = vmatpush1.xpose.msra.mxu0 0.0
    %204 = vmatprep.subr.mxu0 0.0
    %205 = vmatpush1.xpose.msra.mxu0 0.0
    %206 = vmatprep.subr.mxu0 0.0
    %207 = vmatpush1.xpose.msra.mxu0 0.0
    %208 = vmatprep.subr.mxu0 0.0
    %209 = vmatpush1.xpose.msra.mxu0 0.0
    %210 = vmatprep.subr.mxu0 0.0
    %211 = vmatpush1.xpose.msra.mxu0 0.0
    %212 = vmatprep.subr.mxu0 0.0
    %213 = vmatpush1.xpose.msra.mxu0 0.0
    %214 = vmatprep.subr.mxu0 0.0
    %215 = vmatpush1.xpose.msra.mxu0 0.0
    %216 = vmatprep.subr.mxu0 0.0
    %217 = vmatpush1.xpose.msra.mxu0 0.0
    %218 = vmatprep.subr.mxu0 0.0
    %219 = vmatpush1.xpose.msra.mxu0 0.0
    %220 = vmatprep.subr.mxu0 0.0
    %221 = vmatpush1.xpose.msra.mxu0 0.0
    %222 = vmatprep.subr.mxu0 0.0
    %223 = vmatpush1.xpose.msra.mxu0 0.0
    %224 = vmatprep.subr.mxu0 0.0
    %225 = vmatpush1.xpose.msra.mxu0 0.0
    %226 = vmatprep.mubr.f32.mxu0 0.0
    %227 = vmatmul.mubr.f32.gmra.mrb[0].mxu0 %v148
    %v228 = vpop.f32.mrb[0].mxu0
    %v229 = vadd.f32 %v128, %v228
    %v230 = vpop.f32.mrb[0].mxu0
    %231 = vmatprep.mubr.f32.mxu0 0.0
    %232 = vmatmul.mubr.f32.gmra.mrb[0].mxu0 %v151
    %v233 = vpop.f32.mrb[0].mxu0
    %v234 = vadd.f32 %v133, %v233
    %v235 = vpop.f32.mrb[0].mxu0
    %236 = vmatprep.mubr.f32.mxu0 0.0
    %237 = vmatmul.mubr.f32.gmra.mrb[0].mxu0 %v154
    %v238 = vpop.f32.mrb[0].mxu0
    %v239 = vadd.f32 %v138, %v238
    %v240 = vpop.f32.mrb[0].mxu0
    %241 = vmatprep.mubr.f32.mxu0 0.0
    %242 = vmatmul.mubr.f32.gmra.mrb[0].mxu0 %v157
    %v243 = vpop.f32.mrb[0].mxu0
    %v244 = vadd.f32 %v143, %v243
    %v245 = vpop.f32.mrb[0].mxu0
    %246 = vdwg.mxu0
    %v247 = vld [vmem:[%s4] sm:$0xff]
    %v248 = vld [vmem:[%s4 + $0x8] sm:$0xff]
    %v249 = vld [vmem:[%s4 + $0x10] sm:$0xff]
    %v250 = vld [vmem:[%s4 + $0x18] sm:$0xff]
    %252 = vset.pattern.permute.xlu0 0
    %253 = vperm.xlu0 %252, %v247
    %v254 = vpop.permute.xlu0 %253
    %257 = vset.pattern.permute.xlu0 0
    %258 = vperm.xlu0 %257, %v248
    %v259 = vpop.permute.xlu0 %258
    %262 = vset.pattern.permute.xlu0 0
    %263 = vperm.xlu0 %262, %v249
    %v264 = vpop.permute.xlu0 %263
    %267 = vset.pattern.permute.xlu0 0
    %268 = vperm.xlu0 %267, %v250
    %v269 = vpop.permute.xlu0 %268
    %v271 = vadd.f32 %v229, %v254
    %v272 = vadd.f32 %v234, %v259
    %v273 = vadd.f32 %v239, %v264
    %v274 = vadd.f32 %v244, %v269
    %v275 = vmax.f32 %v271, 0.0
    %v276 = vmax.f32 %v272, 0.0
    %v277 = vmax.f32 %v273, 0.0
    %v278 = vmax.f32 %v274, 0.0
    %v279 = vld [vmem:[%s5] sm:$0xff]
    %v280 = vld [vmem:[%s5 + $0x8] sm:$0xff]
    %v281 = vld [vmem:[%s6] sm:$0xff]
    %v282 = vld [vmem:[%s6 + $0x8] sm:$0xff]
    %284 = vset.pattern.permute.xlu0 0
    %285 = vperm.xlu0 %284, %v281
    %v286 = vpop.permute.xlu0 %285
    %289 = vset.pattern.permute.xlu0 0
    %290 = vperm.xlu0 %289, %v282
    %v291 = vpop.permute.xlu0 %290
    %v294 = vsel %vm146, %v279, 0
    %v297 = vsel %vm146, %v280, 0
    %299 = vmatprep.subr.mxu0 0.0
    %300 = vmatpush1.msra.mxu0 %v275
    %301 = vmatprep.subr.mxu0 0.0
    %302 = vmatpush1.msra.mxu0 %v276
    %303 = vmatprep.subr.mxu0 0.0
    %304 = vmatpush1.msra.mxu0 %v277
    %305 = vmatprep.subr.mxu0 0.0
    %306 = vmatpush1.msra.mxu0 %v278
    %307 = vmatprep.subr.mxu0 0.0
    %308 = vmatpush1.msra.mxu0 0.0
    %309 = vmatprep.subr.mxu0 0.0
    %310 = vmatpush1.msra.mxu0 0.0
    %311 = vmatprep.subr.mxu0 0.0
    %312 = vmatpush1.msra.mxu0 0.0
    %313 = vmatprep.subr.mxu0 0.0
    %314 = vmatpush1.msra.mxu0 0.0
    %315 = vmatprep.subr.mxu0 0.0
    %316 = vmatpush1.msra.mxu0 0.0
    %317 = vmatprep.subr.mxu0 0.0
    %318 = vmatpush1.msra.mxu0 0.0
    %319 = vmatprep.subr.mxu0 0.0
    %320 = vmatpush1.msra.mxu0 0.0
    %321 = vmatprep.subr.mxu0 0.0
    %322 = vmatpush1.msra.mxu0 0.0
    %323 = vmatprep.subr.mxu0 0.0
    %324 = vmatpush1.msra.mxu0 0.0
    %325 = vmatprep.subr.mxu0 0.0
    %326 = vmatpush1.msra.mxu0 0.0
    %327 = vmatprep.subr.mxu0 0.0
    %328 = vmatpush1.msra.mxu0 0.0
    %329 = vmatprep.subr.mxu0 0.0
    %330 = vmatpush1.msra.mxu0 0.0
    %331 = vmatprep.subr.mxu0 0.0
    %332 = vmatpush1.msra.mxu0 0.0
    %333 = vmatprep.subr.mxu0 0.0
    %334 = vmatpush1.msra.mxu0 0.0
    %335 = vmatprep.subr.mxu0 0.0
    %336 = vmatpush1.msra.mxu0 0.0
    %337 = vmatprep.subr.mxu0 0.0
    %338 = vmatpush1.msra.mxu0 0.0
    %339 = vmatprep.subr.mxu0 0.0
    %340 = vmatpush1.msra.mxu0 0.0
    %341 = vmatprep.subr.mxu0 0.0
    %342 = vmatpush1.msra.mxu0 0.0
    %343 = vmatprep.subr.mxu0 0.0
    %344 = vmatpush1.msra.mxu0 0.0
    %345 = vmatprep.subr.mxu0 0.0
    %346 = vmatpush1.msra.mxu0 0.0
    %347 = vmatprep.subr.mxu0 0.0
    %348 = vmatpush1.msra.mxu0 0.0
    %349 = vmatprep.subr.mxu0 0.0
    %350 = vmatpush1.msra.mxu0 0.0
    %351 = vmatprep.subr.mxu0 0.0
    %352 = vmatpush1.msra.mxu0 0.0
    %353 = vmatprep.subr.mxu0 0.0
    %354 = vmatpush1.msra.mxu0 0.0
    %355 = vmatprep.subr.mxu0 0.0
    %356 = vmatpush1.msra.mxu0 0.0
    %357 = vmatprep.subr.mxu0 0.0
    %358 = vmatpush1.msra.mxu0 0.0
    %359 = vmatprep.subr.mxu0 0.0
    %360 = vmatpush1.msra.mxu0 0.0
    %361 = vmatprep.subr.mxu0 0.0
    %362 = vmatpush1.msra.mxu0 0.0
    %363 = vmatprep.mubr.f32.mxu0 0.0
    %364 = vmatmul.mubr.f32.gmra.mrb[0].mxu0 %v294
    %v365 = vpop.f32.mrb[0].mxu0
    %v366 = vadd.f32 %v286, %v365
    %v367 = vpop.f32.mrb[0].mxu0
    %368 = vmatprep.mubr.f32.mxu0 0.0
    %369 = vmatmul.mubr.f32.gmra.mrb[0].mxu0 %v297
    %v370 = vpop.f32.mrb[0].mxu0
    %v371 = vadd.f32 %v291, %v370
    %v372 = vpop.f32.mrb[0].mxu0
    %373 = vdwg.mxu0
    %v374 = vmax.f32 %v366, 0.0
    %v375 = vmax.f32 %v371, 0.0
    %v376 = vld [vmem:[%s7] sm:$0xff]
    %v377 = vld [vmem:[%s7 + $0x8] sm:$0xff]
    %379 = vset.pattern.permute.xlu0 0
    %380 = vperm.xlu0 %379, %v376
    %v381 = vpop.permute.xlu0 %380
    %384 = vset.pattern.permute.xlu0 0
    %385 = vperm.xlu0 %384, %v377
    %v386 = vpop.permute.xlu0 %385
    %v388 = vmul.f32 %v374, %v381
    %v389 = vmul.f32 %v375, %v386
    %vm390 = vcmask 64512
    %v391 = vsel %vm390, %v388, 0.0
    %v392 = vsel %vm390, %v389, 0.0
    %v393 = vadd.f32 %v391, %v392
    %v394 = vrot.slane %v393, 4
    %v395 = vadd.f32 %v393, %v394
    %v396 = vrot.slane %v395, 2
    %v397 = vadd.f32 %v395, %v396
    %v398 = vrot.slane %v397, 1
    %v399 = vadd.f32 %v397, %v398
    %v400 = vld [vmem:[#allocation2] sm:$0x1]
    %402 = vset.pattern.permute.xlu0 0
    %403 = vperm.xlu0 %402, %v400
    %v404 = vpop.permute.xlu0 %403
    %v406 = vlaneseq
    %v407 = vshrl.u32 %v406, 7
    %v408 = vsub.s32 0, %v407
    %v409 = vrot.slane %v404, %v408
    %v410 = vadd.f32 %v399, %v409
    %v411 = vsub.f32 0.0, %v410
    %v412 = vmul.f32 %v411, 1.442695
    %v413 = vpow.pop %v412
    %v414 = vadd.f32 %v413, 1.0
    %v415 = vrcp.pop %v414
    %v416 = vmul.f32 1.0, %v415
    %vm417 = vcmask 57344
    %418 = vst.msk [vmem:[#allocation3] sm:$0x1] %vm417, %v416
    // Predicated region
    $region38: #{tpu_custom_call.1} parent=1 // pred_check
      _
    $region39: #{tpu_custom_call.1} parent=1 // pred_check_branch
      %420 = sbr.rel (0) target = $region41
    $region40: #{tpu_custom_call.1} parent=1 // pred_region
      %s422 = ssub.s32 16, 16
      %423 = vsyncadd [#allocation4], %s422
      %s425 = sshll.u32 [#allocation3], 4
      %s426 = int_to_ptr.vmem [resolvable:$true] %s425
      %428 = dma.vmem_to_hbm [thread:$0]  %s426, 16, %s9, [#allocation4]
    $region41: #{tpu_custom_call.1} parent=1 // pred_fallthru
      _
    // Predicated region
    $region42: #{tpu_custom_call.1} parent=1 // pred_check
      _
    $region43: #{tpu_custom_call.1} parent=1 // pred_check_branch
      %430 = sbr.rel (0) target = $region45
    $region44: #{tpu_custom_call.1} parent=1 // pred_region
      %431 = dma.done [#allocation4], 16
    $region45: #{tpu_custom_call.1} parent=1 // pred_fallthru
      _
    %432 = vsyncpa [#allocation4], 1

</llo_original>
